<compile_context>
chip_gen: v7x
topology: tpu7x:2x2x1
jax: 0.10.0
libtpu: 0.0.40
codegen_flags: <defaults>
</compile_context>

<pallas_src>
import functools

import jax
import jax.numpy as jnp
from jax.experimental import pallas as pl
from jax.experimental.pallas import tpu as pltpu


def _round_up(x, m):
    return (x + m - 1) // m * m


def _cdiv(a, b):
    return (a + b - 1) // b


def _default_bf16_epilogue():
    """bf16 layer-1 epilogue on chips with a native-bf16 VPU (v6e/v7x)."""
    try:
        kind = jax.devices()[0].device_kind.lower()
    except Exception:
        return False
    for old in ("v2", "v3", "v4", "v5"):
        if old in kind:
            return False
    return "tpu" in kind or "v6" in kind or "v7" in kind


def _make_kernel(bf16_epilogue):
    def critic_kernel(state_ref, action_ref,
                      w1_ref, b1_ref,
                      w2s_ref, w2a_ref, b2_ref,
                      w3_ref, b3_ref,
                      out_ref):
        # In-kernel f32 -> bf16 casts (cheap VPU ops hidden under the matmuls;
        # keeps the activation HBM traffic to a single f32 read).
        s_bf = state_ref[...].astype(jnp.bfloat16)
        a_bf = action_ref[...].astype(jnp.bfloat16)

        # Layer 1: relu(state @ W1^T + b1)   (bf16 operands, f32 MXU acc).
        xs32 = jnp.dot(s_bf, w1_ref[...], preferred_element_type=jnp.float32)
        if bf16_epilogue:
            # v6e/v7x: native bf16 VPU -> bias + ReLU in bf16, feeds layer 2
            # directly (no standalone cast pass).
            xs = jnp.maximum(xs32.astype(jnp.bfloat16)
                             + b1_ref[...].astype(jnp.bfloat16), 0.0)
        else:
            # v5e: VPU has no bf16 -> keep the epilogue in f32, cast once.
            xs = jnp.maximum(xs32 + b1_ref[...], 0.0).astype(jnp.bfloat16)

        # Layer 2: relu(concat(xs, action) @ W2^T + b2) as a split matmul
        # (avoids a non-128-aligned lane concat).
        h = (jnp.dot(xs, w2s_ref[...], preferred_element_type=jnp.float32)
             + jnp.dot(a_bf, w2a_ref[...], preferred_element_type=jnp.float32))
        h = jnp.maximum(h + b2_ref[...], 0.0)                   # [tb, F2] f32

        # Layer 3: single output feature -> VPU multiply + lane reduction
        # (keeps a dependent N=1 MXU matmul off the critical path).
        row = jnp.sum(h * w3_ref[...], axis=-1) + b3_ref[0]     # [tb] f32
        out_ref[...] = row.reshape(1, 1, row.shape[0])          # lane-dense

    return critic_kernel


@functools.partial(jax.jit, static_argnames=("block_b", "bf16_epilogue"))
def critic_forward(state, action, params, *, block_b=2048, bf16_epilogue=None):
    """state: [B, S] f32, action: [B, A] f32 -> [B, 1] f32."""
    if bf16_epilogue is None:
        bf16_epilogue = _default_bf16_epilogue()

    w1_t, b1, w2s_t, w2a_t, b2, w3_row, b3 = params
    B, S = state.shape
    _, A = action.shape
    F1 = w1_t.shape[1]
    F2 = w2s_t.shape[1]
    A_pad = w2a_t.shape[0]

    # Batch-tile choice:
    #  * small B: one tile, rounded to 8 sublanes.
    #  * larger B: at least 2 grid steps (so v7x's two TensorCores both get
    #    work via the "parallel" axis), lane/store-friendly multiple of 128,
    #    capped at block_b (per-step VMEM stays in the few-MiB range).
    if B <= 128:
        tb = _round_up(B, 8)
    else:
        tb = min(_round_up(block_b, 128), _round_up(_cdiv(B, 2), 128))
    n_tiles = _cdiv(B, tb)

    # Only remaining wrapper op: zero-pad action features to the sublane-
    # padded width of W2's action slab (tiny; state goes in untouched).
    # No batch padding: ragged last block rows are independent and their
    # outputs are discarded by the [:B] slice below.
    if A_pad != A:
        action_in = jnp.pad(action, ((0, 0), (0, A_pad - A)))
    else:
        action_in = action

    resident = lambda shape: pl.BlockSpec(shape, lambda i: (0,) * len(shape))

    out = pl.pallas_call(
        _make_kernel(bf16_epilogue),
        out_shape=jax.ShapeDtypeStruct((n_tiles, 1, tb), jnp.float32),
        grid=(n_tiles,),
        in_specs=[
            pl.BlockSpec((tb, S), lambda i: (i, 0)),        # state tile (f32)
            pl.BlockSpec((tb, A_pad), lambda i: (i, 0)),    # action tile (f32)
            resident((S, F1)),                              # W1^T      (bf16)
            resident((1, F1)),                              # b1        (f32)
            resident((F1, F2)),                             # W2^T[:F1] (bf16)
            resident((A_pad, F2)),                          # W2^T[F1:] (bf16)
            resident((1, F2)),                              # b2        (f32)
            resident((1, F2)),                              # W3 row    (f32)
            pl.BlockSpec(memory_space=pltpu.MemorySpace.SMEM),  # b3 scalar
        ],
        out_specs=pl.BlockSpec((1, 1, tb), lambda i: (i, 0, 0)),
        compiler_params=pltpu.CompilerParams(
            dimension_semantics=("parallel",),   # shard batch steps across TCs
            vmem_limit_bytes=32 * 1024 * 1024,
        ),
    )(state, action_in, w1_t, b1, w2s_t, w2a_t, b2, w3_row, b3)

    return out.reshape(n_tiles * tb, 1)[:B]


def init_params(key, state_size, action_size, fcs1_units=128, fc2_units=128):
    """Deterministic init mirroring ModuleCritic.reset_parameters ranges.

    PyTorch Linear weights are [out, in]; we store the transpose [in, out].
    MXU-facing weights are kept in bf16, VPU-facing params (biases, W3 row)
    in f32.  W2's action slab is zero-padded to a multiple of 8 rows.
    """
    k1, k2, k3, kb1, kb2, kb3 = jax.random.split(key, 6)

    lim1 = 1.0 / (fcs1_units ** 0.5)    # func_hidden_init(fcs1)
    lim2 = 1.0 / (fc2_units ** 0.5)     # func_hidden_init(fc2)
    a_pad = _round_up(action_size, 8)

    w1_t = jax.random.uniform(k1, (state_size, fcs1_units),
                              minval=-lim1, maxval=lim1, dtype=jnp.float32)
    w2_t = jax.random.uniform(k2, (fcs1_units + action_size, fc2_units),
                              minval=-lim2, maxval=lim2, dtype=jnp.float32)
    w3_t = jax.random.uniform(k3, (fc2_units, 1),
                              minval=-0.003, maxval=0.003, dtype=jnp.float32)

    b1 = jax.random.uniform(kb1, (1, fcs1_units),
                            minval=-lim1, maxval=lim1, dtype=jnp.float32)
    b2 = jax.random.uniform(kb2, (1, fc2_units),
                            minval=-lim2, maxval=lim2, dtype=jnp.float32)
    b3 = jax.random.uniform(kb3, (1,),
                            minval=-0.003, maxval=0.003, dtype=jnp.float32)

    # Split W2^T into the part multiplying xs and the (padded) action part.
    w2s_t = w2_t[:fcs1_units, :]
    w2a_t = jnp.zeros((a_pad, fc2_units), jnp.float32)
    w2a_t = w2a_t.at[:action_size, :].set(w2_t[fcs1_units:, :])
    w3_row = w3_t.T                                       # [1, F2]

    return (w1_t.astype(jnp.bfloat16), b1,
            w2s_t.astype(jnp.bfloat16), w2a_t.astype(jnp.bfloat16), b2,
            w3_row, b3)


def reference_forward(state, action, params, bf16_epilogue=None):
    """Pure-JAX reference matching the kernel's mixed-precision math.

    NOTE: this validates kernel-vs-bf16-JAX (same bf16 weights/activations),
    not vs a strict f32 PyTorch ModuleCritic.
    """
    if bf16_epilogue is None:
        bf16_epilogue = _default_bf16_epilogue()
    w1_t, b1, w2s_t, w2a_t, b2, w3_row, b3 = params
    A = action.shape[1]

    xs32 = jnp.dot(state.astype(jnp.bfloat16), w1_t,
                   preferred_element_type=jnp.float32)
    if bf16_epilogue:
        xs = jax.nn.relu(xs32.astype(jnp.bfloat16) + b1.astype(jnp.bfloat16))
    else:
        xs = jax.nn.relu(xs32 + b1).astype(jnp.bfloat16)

    h = (jnp.dot(xs, w2s_t, preferred_element_type=jnp.float32)
         + jnp.dot(action.astype(jnp.bfloat16), w2a_t[:A, :],
                   preferred_element_type=jnp.float32))
    h = jax.nn.relu(h + b2)
    return jnp.sum(h * w3_row, axis=-1, keepdims=True) + b3


if __name__ == "__main__":
    B, STATE_SIZE, ACTION_SIZE = 8, 16, 4

    key = jax.random.PRNGKey(0)
    kp, ks, ka = jax.random.split(key, 3)

    params = init_params(kp, STATE_SIZE, ACTION_SIZE)
    state = jax.random.normal(ks, (B, STATE_SIZE), dtype=jnp.float32)
    action = jax.random.normal(ka, (B, ACTION_SIZE), dtype=jnp.float32)

    out = critic_forward(state, action, params)
    out = jax.block_until_ready(out)

    ref = reference_forward(state, action, params)
    assert out.shape == (B, 1), out.shape
    assert jnp.allclose(out, ref, atol=2e-3, rtol=2e-3), (out, ref)

    print("KERNEL_OK")
</pallas_src>

<mosaic_0001>
module attributes {stable_mosaic.version = 11 : i64} {
  func.func @critic_kernel(%arg0: i32, %arg1: memref<8x16xf32, #tpu.memory_space<vmem>>, %arg2: memref<8x8xf32, #tpu.memory_space<vmem>>, %arg3: memref<16x128xbf16, #tpu.memory_space<vmem>>, %arg4: memref<1x128xf32, #tpu.memory_space<vmem>>, %arg5: memref<128x128xbf16, #tpu.memory_space<vmem>>, %arg6: memref<8x128xbf16, #tpu.memory_space<vmem>>, %arg7: memref<1x128xf32, #tpu.memory_space<vmem>>, %arg8: memref<1x128xf32, #tpu.memory_space<vmem>>, %arg9: memref<1xf32, #tpu.memory_space<smem>>, %arg10: memref<1x1x8xf32, #tpu.memory_space<vmem>>) attributes {dimension_semantics = [#tpu.dimension_semantics<parallel>], iteration_bounds = array<i64: 1>, scalar_prefetch = 0 : i64, scratch_operands = 0 : i64, tpu.core_type = #tpu.core_type<tc>, window_params = [{transform_indices = @transform_0, window_bounds = array<i64: 8, 16>}, {transform_indices = @transform_1, window_bounds = array<i64: 8, 8>}, {pipeline_mode = #tpu.pipeline_mode<synchronous>, transform_indices = @transform_2, window_bounds = array<i64: 16, 128>}, {pipeline_mode = #tpu.pipeline_mode<synchronous>, transform_indices = @transform_3, window_bounds = array<i64: 1, 128>}, {pipeline_mode = #tpu.pipeline_mode<synchronous>, transform_indices = @transform_4, window_bounds = array<i64: 128, 128>}, {pipeline_mode = #tpu.pipeline_mode<synchronous>, transform_indices = @transform_5, window_bounds = array<i64: 8, 128>}, {pipeline_mode = #tpu.pipeline_mode<synchronous>, transform_indices = @transform_6, window_bounds = array<i64: 1, 128>}, {pipeline_mode = #tpu.pipeline_mode<synchronous>, transform_indices = @transform_7, window_bounds = array<i64: 1, 128>}, {transform_indices = @transform_8, window_bounds = array<i64: 1>}, {transform_indices = @transform_9, window_bounds = array<i64: 1, 1, 8>}]} {
    %c0 = arith.constant 0 : index
    %c0_0 = arith.constant 0 : index
    %0 = vector.load %arg1[%c0, %c0_0] : memref<8x16xf32, #tpu.memory_space<vmem>>, vector<8x16xf32>
    %1 = arith.truncf %0 : vector<8x16xf32> to vector<8x16xbf16>
    %c0_1 = arith.constant 0 : index
    %c0_2 = arith.constant 0 : index
    %2 = vector.load %arg2[%c0_1, %c0_2] : memref<8x8xf32, #tpu.memory_space<vmem>>, vector<8x8xf32>
    %3 = arith.truncf %2 : vector<8x8xf32> to vector<8x8xbf16>
    %c0_3 = arith.constant 0 : index
    %c0_4 = arith.constant 0 : index
    %4 = vector.load %arg3[%c0_3, %c0_4] : memref<16x128xbf16, #tpu.memory_space<vmem>>, vector<16x128xbf16>
    %cst = arith.constant dense<0.000000e+00> : vector<8x128xf32>
    %5 = tpu.matmul %1, %4, %cst {dimension_numbers = #tpu.dot_dimension_numbers<[1], [0], [0], [1], [0, 0, 1, 1], [], []>} : vector<8x16xbf16>, vector<16x128xbf16>, vector<8x128xf32> -> vector<8x128xf32>
    %c0_5 = arith.constant 0 : index
    %c0_6 = arith.constant 0 : index
    %6 = vector.load %arg4[%c0_5, %c0_6] : memref<1x128xf32, #tpu.memory_space<vmem>>, vector<1x128xf32>
    %7 = vector.broadcast %6 : vector<1x128xf32> to vector<8x128xf32>
    %8 = arith.addf %5, %7 : vector<8x128xf32>
    %cst_7 = arith.constant 0.000000e+00 : f32
    %9 = vector.broadcast %cst_7 : f32 to vector<8x128xf32>
    %10 = arith.maximumf %8, %9 : vector<8x128xf32>
    %11 = arith.truncf %10 : vector<8x128xf32> to vector<8x128xbf16>
    %c0_8 = arith.constant 0 : index
    %c0_9 = arith.constant 0 : index
    %12 = vector.load %arg5[%c0_8, %c0_9] : memref<128x128xbf16, #tpu.memory_space<vmem>>, vector<128x128xbf16>
    %cst_10 = arith.constant dense<0.000000e+00> : vector<8x128xf32>
    %13 = tpu.matmul %11, %12, %cst_10 {dimension_numbers = #tpu.dot_dimension_numbers<[1], [0], [0], [1], [0, 0, 1, 1], [], []>} : vector<8x128xbf16>, vector<128x128xbf16>, vector<8x128xf32> -> vector<8x128xf32>
    %c0_11 = arith.constant 0 : index
    %c0_12 = arith.constant 0 : index
    %14 = vector.load %arg6[%c0_11, %c0_12] : memref<8x128xbf16, #tpu.memory_space<vmem>>, vector<8x128xbf16>
    %cst_13 = arith.constant dense<0.000000e+00> : vector<8x128xf32>
    %15 = tpu.matmul %3, %14, %cst_13 {dimension_numbers = #tpu.dot_dimension_numbers<[1], [0], [0], [1], [0, 0, 1, 1], [], []>} : vector<8x8xbf16>, vector<8x128xbf16>, vector<8x128xf32> -> vector<8x128xf32>
    %16 = arith.addf %13, %15 : vector<8x128xf32>
    %c0_14 = arith.constant 0 : index
    %c0_15 = arith.constant 0 : index
    %17 = vector.load %arg7[%c0_14, %c0_15] : memref<1x128xf32, #tpu.memory_space<vmem>>, vector<1x128xf32>
    %18 = vector.broadcast %17 : vector<1x128xf32> to vector<8x128xf32>
    %19 = arith.addf %16, %18 : vector<8x128xf32>
    %cst_16 = arith.constant 0.000000e+00 : f32
    %20 = vector.broadcast %cst_16 : f32 to vector<8x128xf32>
    %21 = arith.maximumf %19, %20 : vector<8x128xf32>
    %c0_17 = arith.constant 0 : index
    %c0_18 = arith.constant 0 : index
    %22 = vector.load %arg8[%c0_17, %c0_18] : memref<1x128xf32, #tpu.memory_space<vmem>>, vector<1x128xf32>
    %23 = vector.broadcast %22 : vector<1x128xf32> to vector<8x128xf32>
    %24 = arith.mulf %21, %23 : vector<8x128xf32>
    %cst_19 = arith.constant dense<0.000000e+00> : vector<8xf32>
    %25 = vector.multi_reduction <add>, %24, %cst_19 [1] : vector<8x128xf32> to vector<8xf32>
    %c0_20 = arith.constant 0 : index
    %26 = memref.load %arg9[%c0_20] : memref<1xf32, #tpu.memory_space<smem>>
    %27 = vector.broadcast %26 : f32 to vector<8xf32>
    %28 = arith.addf %25, %27 : vector<8xf32>
    %29 = vector.shape_cast %28 : vector<8xf32> to vector<1x1x8xf32>
    %c0_21 = arith.constant 0 : index
    %c0_22 = arith.constant 0 : index
    %c0_23 = arith.constant 0 : index
    %30 = vector.load %arg10[%c0_21, %c0_22, %c0_23] : memref<1x1x8xf32, #tpu.memory_space<vmem>>, vector<1x1x8xf32>
    tpu.vector_store %arg10[%c0_21, %c0_22, %c0_23], %29 {strides = array<i32>} : memref<1x1x8xf32, #tpu.memory_space<vmem>>, vector<1x1x8xf32>,
    return
  }
  func.func @transform_0(%arg0: i32) -> (i32, i32) {
    %c0_i32 = arith.constant 0 : i32
    %c0_i32_0 = arith.constant 0 : i32
    return %arg0, %c0_i32 : i32, i32
  }
  func.func @transform_1(%arg0: i32) -> (i32, i32) {
    %c0_i32 = arith.constant 0 : i32
    %c0_i32_0 = arith.constant 0 : i32
    return %arg0, %c0_i32 : i32, i32
  }
  func.func @transform_2(%arg0: i32) -> (i32, i32) {
    %c0_i32 = arith.constant 0 : i32
    %c0_i32_0 = arith.constant 0 : i32
    %c0_i32_1 = arith.constant 0 : i32
    return %c0_i32, %c0_i32_0 : i32, i32
  }
  func.func @transform_3(%arg0: i32) -> (i32, i32) {
    %c0_i32 = arith.constant 0 : i32
    %c0_i32_0 = arith.constant 0 : i32
    %c0_i32_1 = arith.constant 0 : i32
    return %c0_i32, %c0_i32_0 : i32, i32
  }
  func.func @transform_4(%arg0: i32) -> (i32, i32) {
    %c0_i32 = arith.constant 0 : i32
    %c0_i32_0 = arith.constant 0 : i32
    %c0_i32_1 = arith.constant 0 : i32
    return %c0_i32, %c0_i32_0 : i32, i32
  }
  func.func @transform_5(%arg0: i32) -> (i32, i32) {
    %c0_i32 = arith.constant 0 : i32
    %c0_i32_0 = arith.constant 0 : i32
    %c0_i32_1 = arith.constant 0 : i32
    return %c0_i32, %c0_i32_0 : i32, i32
  }
  func.func @transform_6(%arg0: i32) -> (i32, i32) {
    %c0_i32 = arith.constant 0 : i32
    %c0_i32_0 = arith.constant 0 : i32
    %c0_i32_1 = arith.constant 0 : i32
    return %c0_i32, %c0_i32_0 : i32, i32
  }
  func.func @transform_7(%arg0: i32) -> (i32, i32) {
    %c0_i32 = arith.constant 0 : i32
    %c0_i32_0 = arith.constant 0 : i32
    %c0_i32_1 = arith.constant 0 : i32
    return %c0_i32, %c0_i32_0 : i32, i32
  }
  func.func @transform_8(%arg0: i32) -> i32 {
    %c0_i32 = arith.constant 0 : i32
    %c0_i32_0 = arith.constant 0 : i32
    return %c0_i32 : i32
  }
  func.func @transform_9(%arg0: i32) -> (i32, i32, i32) {
    %c0_i32 = arith.constant 0 : i32
    %c0_i32_0 = arith.constant 0 : i32
    %c0_i32_1 = arith.constant 0 : i32
    return %arg0, %c0_i32, %c0_i32_0 : i32, i32, i32
  }
}

</mosaic_0001>

<llo_original>
// kernel: critic_forward.1
$region0: #{critic_forward.1}
  #allocation0 [shape = 'u32[]', space=smem, size = 0x4, offset = 0x4, fixed_abs, tag = 'smem constant byte address 0x4 - core index']
  #allocation1 [shape = 'u32[144,128]{1,0:T(1,128)}', space=vmem, size = 0x12000, scoped, tag = 'internal scratch']
  #allocation2 [shape = 'f32[1]{0:T(128)S(6)}', space=smem, size = 0x200, scoped, tag = 'scoped memory for critic_forward.1']
  %s0 = inlined_call_operand.vmem [shape: f32[8,16], index: 0, kind: input, shape index: {}]
  %s1 = inlined_call_operand.vmem [shape: f32[8,8], index: 1, kind: input, shape index: {}]
  %s2 = inlined_call_operand.vmem [shape: bf16[16,128], index: 2, kind: input, shape index: {}]
  %s3 = inlined_call_operand.vmem [shape: f32[1,128], index: 3, kind: input, shape index: {}]
  %s4 = inlined_call_operand.hbm [shape: bf16[128,128], index: 4, kind: input, shape index: {}]
  %s5 = inlined_call_operand.vmem [shape: bf16[8,128], index: 5, kind: input, shape index: {}]
  %s6 = inlined_call_operand.vmem [shape: f32[1,128], index: 6, kind: input, shape index: {}]
  %s7 = inlined_call_operand.vmem [shape: f32[1,128], index: 7, kind: input, shape index: {}]
  %s8 = inlined_call_operand.<no memory space> [shape: f32[1], index: 8, kind: input, shape index: {}]
  %s9 = inlined_call_operand.hbm [shape: f32[1,1,8], index: 9, kind: output, shape index: {}]
  %s10 = sld [smem:[#allocation0]]
  $region50: #{critic_forward.1} parent=0
    _
  %s12 = ssub.s32 1, %s10
  %s13 = scalar_select 0, %s12, %s10
  %14 = sst [smem:[#allocation2]] %s8
  $region1: #{critic_forward.1} parent=0
    #allocation3 [shape = 'u8[32768]{0}', space=vmem, size = 0x8000, scoped, tag = 'input window, operand 4, single buffered']
    #allocation4 [shape = 's32[1]{0}', space=sflag, size = 0x4, scoped, tag = 'scoped memory for critic_forward.1']
    #allocation5 [shape = 's32[1]{0}', space=sflag, size = 0x4, scoped, tag = 'scoped memory for critic_forward.1']
    #allocation6 [shape = 'u8[512]{0}', space=vmem, size = 0x400, scoped, tag = 'output window, operand 0, single buffered']
    %15 = vsyncpa [#allocation4], 0
    %16 = vsyncpa [#allocation5], 0
    // Predicated region
    $region2: #{critic_forward.1} parent=1 // pred_check
      _
    $region3: #{critic_forward.1} parent=1 // pred_check_branch
      %18 = sbr.rel (0) target = $region5
    $region4: #{critic_forward.1} parent=1 // pred_region
      _
    $region5: #{critic_forward.1} parent=1 // pred_fallthru
      _
    // Predicated region
    $region6: #{critic_forward.1} parent=1 // pred_check
      _
    $region7: #{critic_forward.1} parent=1 // pred_check_branch
      %20 = sbr.rel (0) target = $region9
    $region8: #{critic_forward.1} parent=1 // pred_region
      _
    $region9: #{critic_forward.1} parent=1 // pred_fallthru
      _
    // Predicated region
    $region10: #{critic_forward.1} parent=1 // pred_check
      _
    $region11: #{critic_forward.1} parent=1 // pred_check_branch
      %22 = sbr.rel (0) target = $region13
    $region12: #{critic_forward.1} parent=1 // pred_region
      _
    $region13: #{critic_forward.1} parent=1 // pred_fallthru
      _
    // Predicated region
    $region14: #{critic_forward.1} parent=1 // pred_check
      _
    $region15: #{critic_forward.1} parent=1 // pred_check_branch
      %24 = sbr.rel (0) target = $region17
    $region16: #{critic_forward.1} parent=1 // pred_region
      _
    $region17: #{critic_forward.1} parent=1 // pred_fallthru
      _
    // Predicated region
    $region18: #{critic_forward.1} parent=1 // pred_check
      _
    $region19: #{critic_forward.1} parent=1 // pred_check_branch
      %26 = sbr.rel (0) target = $region21
    $region20: #{critic_forward.1} parent=1 // pred_region
      %s28 = ssub.s32 1024, 1024
      %29 = vsyncadd [#allocation4], %s28
      %s30 = sshll.u32 [#allocation3], 4
      %s31 = int_to_ptr.vmem [resolvable:$true] %s30
      %36 = dma.hbm_to_vmem [thread:$0]  %s4, 1024, %s31, [#allocation4], 64, 64, 4
    $region21: #{critic_forward.1} parent=1 // pred_fallthru
      _
    // Predicated region
    $region22: #{critic_forward.1} parent=1 // pred_check
      _
    $region23: #{critic_forward.1} parent=1 // pred_check_branch
      %38 = sbr.rel (0) target = $region25
    $region24: #{critic_forward.1} parent=1 // pred_region
      _
    $region25: #{critic_forward.1} parent=1 // pred_fallthru
      _
    // Predicated region
    $region26: #{critic_forward.1} parent=1 // pred_check
      _
    $region27: #{critic_forward.1} parent=1 // pred_check_branch
      %40 = sbr.rel (0) target = $region29
    $region28: #{critic_forward.1} parent=1 // pred_region
      _
    $region29: #{critic_forward.1} parent=1 // pred_fallthru
      _
    // Predicated region
    $region30: #{critic_forward.1} parent=1 // pred_check
      _
    $region31: #{critic_forward.1} parent=1 // pred_check_branch
      %42 = sbr.rel (0) target = $region33
    $region32: #{critic_forward.1} parent=1 // pred_region
      _
    $region33: #{critic_forward.1} parent=1 // pred_fallthru
      _
    // Predicated region
    $region34: #{critic_forward.1} parent=1 // pred_check
      _
    $region35: #{critic_forward.1} parent=1 // pred_check_branch
      %44 = sbr.rel (0) target = $region37
    $region36: #{critic_forward.1} parent=1 // pred_region
      _
    $region37: #{critic_forward.1} parent=1 // pred_fallthru
      _
    // Predicated region
    $region38: #{critic_forward.1} parent=1 // pred_check
      _
    $region39: #{critic_forward.1} parent=1 // pred_check_branch
      %46 = sbr.rel (0) target = $region41
    $region40: #{critic_forward.1} parent=1 // pred_region
      %47 = dma.done [#allocation4], 1024
    $region41: #{critic_forward.1} parent=1 // pred_fallthru
      _
    %v49 = vld [vmem:[%s0] sm:$0xff]
    %v50 = vpack.c.bf16 %v49, %v49
    %v51 = vld [vmem:[%s1] sm:$0xff]
    %v52 = vpack.c.bf16 %v51, %v51
    %v53 = vld [vmem:[%s2] sm:$0xf]
    %v54 = vld [vmem:[%s2 + $0x4] sm:$0xf]
    %v55 = vld [vmem:[%s3] sm:$0x1]
    %v57 = vlaneseq
    %v58 = vshrl.u32 %v57, 7
    %v59 = vsub.s32 0, %v58
    %v60 = vrot.slane %v55, %v59
    %v64 = vunpack.c.l.b16 %v53
    %v65 = vunpack.c.l.b16 %v54
    %v66 = vpack.c.b16 %v65, %v64
    %vm68 = vcmask 130048
    %v70 = vsel %vm68, %v50, 0
    %72 = vmatprep.subr.bf16.mxu0 0
    %73 = vmatpush1.bf16.msra.mxu0 %v66
    %74 = vmatprep.subr.bf16.mxu0 0
    %75 = vmatpush1.bf16.msra.mxu0 0
    %76 = vmatprep.subr.bf16.mxu0 0
    %77 = vmatpush1.bf16.msra.mxu0 0
    %78 = vmatprep.subr.bf16.mxu0 0
    %79 = vmatpush1.bf16.msra.mxu0 0
    %80 = vmatprep.subr.bf16.mxu0 0
    %81 = vmatpush1.bf16.msra.mxu0 0
    %82 = vmatprep.subr.bf16.mxu0 0
    %83 = vmatpush1.bf16.msra.mxu0 0
    %84 = vmatprep.subr.bf16.mxu0 0
    %85 = vmatpush1.bf16.msra.mxu0 0
    %86 = vmatprep.subr.bf16.mxu0 0
    %87 = vmatpush1.bf16.msra.mxu0 0
    %88 = vmatprep.subr.bf16.mxu0 0
    %89 = vmatpush1.bf16.msra.mxu0 0
    %90 = vmatprep.subr.bf16.mxu0 0
    %91 = vmatpush1.bf16.msra.mxu0 0
    %92 = vmatprep.subr.bf16.mxu0 0
    %93 = vmatpush1.bf16.msra.mxu0 0
    %94 = vmatprep.subr.bf16.mxu0 0
    %95 = vmatpush1.bf16.msra.mxu0 0
    %96 = vmatprep.subr.bf16.mxu0 0
    %97 = vmatpush1.bf16.msra.mxu0 0
    %98 = vmatprep.subr.bf16.mxu0 0
    %99 = vmatpush1.bf16.msra.mxu0 0
    %100 = vmatprep.subr.bf16.mxu0 0
    %101 = vmatpush1.bf16.msra.mxu0 0
    %102 = vmatprep.subr.bf16.mxu0 0
    %103 = vmatpush1.bf16.msra.mxu0 0
    %104 = vmatprep.mubr.bf16.mxu0 0
    %105 = vmatmul.mubr.bf16.gmra.mrb[0].mxu0 %v70
    %v106 = vpop.f32.mrb[0].mxu0
    %v107 = vadd.f32 %v60, %v106
    %v108 = vpop.f32.mrb[0].mxu0
    %v109 = vpop.f32.mrb[0].mxu0
    %v110 = vpop.f32.mrb[0].mxu0
    %111 = vdwg.mxu0
    %v112 = vmax.f32 %v107, 0.0
    %v113 = vpack.c.bf16 %v112, %v112
    %v114 = vld [vmem:[#allocation3] sm:$0xf]
    %v115 = vld [vmem:[#allocation3 + $0x4] sm:$0xf]
    %v116 = vld [vmem:[#allocation3 + $0x8] sm:$0xf]
    %v117 = vld [vmem:[#allocation3 + $0xc] sm:$0xf]
    %v118 = vld [vmem:[#allocation3 + $0x10] sm:$0xf]
    %v119 = vld [vmem:[#allocation3 + $0x14] sm:$0xf]
    %v120 = vld [vmem:[#allocation3 + $0x18] sm:$0xf]
    %v121 = vld [vmem:[#allocation3 + $0x1c] sm:$0xf]
    %v122 = vld [vmem:[#allocation3 + $0x20] sm:$0xf]
    %v123 = vld [vmem:[#allocation3 + $0x24] sm:$0xf]
    %v124 = vld [vmem:[#allocation3 + $0x28] sm:$0xf]
    %v125 = vld [vmem:[#allocation3 + $0x2c] sm:$0xf]
    %v126 = vld [vmem:[#allocation3 + $0x30] sm:$0xf]
    %v127 = vld [vmem:[#allocation3 + $0x34] sm:$0xf]
    %v128 = vld [vmem:[#allocation3 + $0x38] sm:$0xf]
    %v129 = vld [vmem:[#allocation3 + $0x3c] sm:$0xf]
    %v130 = vld [vmem:[%s5] sm:$0xf]
    %vm131 = vcmask 64512
    %v133 = vsel %vm131, %v52, 0
    %vm135 = vcmask 1043456
    %v137 = vsel %vm135, %v130, 0
    %139 = vmatprep.subr.bf16.mxu0 0
    %140 = vmatpush1.bf16.msra.mxu0 %v137
    %141 = vmatprep.subr.bf16.mxu0 0
    %142 = vmatpush1.bf16.msra.mxu0 0
    %143 = vmatprep.subr.bf16.mxu0 0
    %144 = vmatpush1.bf16.msra.mxu0 0
    %145 = vmatprep.subr.bf16.mxu0 0
    %146 = vmatpush1.bf16.msra.mxu0 0
    %147 = vmatprep.subr.bf16.mxu0 0
    %148 = vmatpush1.bf16.msra.mxu0 0
    %149 = vmatprep.subr.bf16.mxu0 0
    %150 = vmatpush1.bf16.msra.mxu0 0
    %151 = vmatprep.subr.bf16.mxu0 0
    %152 = vmatpush1.bf16.msra.mxu0 0
    %153 = vmatprep.subr.bf16.mxu0 0
    %154 = vmatpush1.bf16.msra.mxu0 0
    %155 = vmatprep.subr.bf16.mxu0 0
    %156 = vmatpush1.bf16.msra.mxu0 0
    %157 = vmatprep.subr.bf16.mxu0 0
    %158 = vmatpush1.bf16.msra.mxu0 0
    %159 = vmatprep.subr.bf16.mxu0 0
    %160 = vmatpush1.bf16.msra.mxu0 0
    %161 = vmatprep.subr.bf16.mxu0 0
    %162 = vmatpush1.bf16.msra.mxu0 0
    %163 = vmatprep.subr.bf16.mxu0 0
    %164 = vmatpush1.bf16.msra.mxu0 0
    %165 = vmatprep.subr.bf16.mxu0 0
    %166 = vmatpush1.bf16.msra.mxu0 0
    %167 = vmatprep.subr.bf16.mxu0 0
    %168 = vmatpush1.bf16.msra.mxu0 0
    %169 = vmatprep.subr.bf16.mxu0 0
    %170 = vmatpush1.bf16.msra.mxu0 0
    %171 = vmatprep.mubr.bf16.mxu0 0
    %172 = vmatmul.mubr.bf16.gmra.mrb[0].mxu0 %v133
    %v173 = vpop.f32.mrb[0].mxu0
    %v174 = vadd.f32 0.0, %v173
    %v175 = vpop.f32.mrb[0].mxu0
    %v176 = vpop.f32.mrb[0].mxu0
    %v177 = vpop.f32.mrb[0].mxu0
    %178 = vdwg.mxu0
    %v195 = vunpack.c.l.b16 %v114
    %v196 = vunpack.c.l.b16 %v115
    %v197 = vunpack.c.l.b16 %v116
    %v198 = vunpack.c.l.b16 %v117
    %v199 = vunpack.c.l.b16 %v118
    %v200 = vunpack.c.l.b16 %v119
    %v201 = vunpack.c.l.b16 %v120
    %v202 = vunpack.c.l.b16 %v121
    %v203 = vunpack.c.l.b16 %v122
    %v204 = vunpack.c.l.b16 %v123
    %v205 = vunpack.c.l.b16 %v124
    %v206 = vunpack.c.l.b16 %v125
    %v207 = vunpack.c.l.b16 %v126
    %v208 = vunpack.c.l.b16 %v127
    %v209 = vunpack.c.l.b16 %v128
    %v210 = vunpack.c.l.b16 %v129
    %v211 = vpack.c.b16 %v196, %v195
    %v212 = vpack.c.b16 %v198, %v197
    %v213 = vpack.c.b16 %v200, %v199
    %v214 = vpack.c.b16 %v202, %v201
    %v215 = vpack.c.b16 %v204, %v203
    %v216 = vpack.c.b16 %v206, %v205
    %v217 = vpack.c.b16 %v208, %v207
    %v218 = vpack.c.b16 %v210, %v209
    %227 = vmatprep.subr.bf16.mxu0 0
    %228 = vmatpush1.bf16.msra.mxu0 %v211
    %229 = vmatprep.subr.bf16.mxu0 0
    %230 = vmatpush1.bf16.msra.mxu0 %v212
    %231 = vmatprep.subr.bf16.mxu0 0
    %232 = vmatpush1.bf16.msra.mxu0 %v213
    %233 = vmatprep.subr.bf16.mxu0 0
    %234 = vmatpush1.bf16.msra.mxu0 %v214
    %235 = vmatprep.subr.bf16.mxu0 0
    %236 = vmatpush1.bf16.msra.mxu0 %v215
    %237 = vmatprep.subr.bf16.mxu0 0
    %238 = vmatpush1.bf16.msra.mxu0 %v216
    %239 = vmatprep.subr.bf16.mxu0 0
    %240 = vmatpush1.bf16.msra.mxu0 %v217
    %241 = vmatprep.subr.bf16.mxu0 0
    %242 = vmatpush1.bf16.msra.mxu0 %v218
    %243 = vmatprep.subr.bf16.mxu0 0
    %244 = vmatpush1.bf16.msra.mxu0 0
    %245 = vmatprep.subr.bf16.mxu0 0
    %246 = vmatpush1.bf16.msra.mxu0 0
    %247 = vmatprep.subr.bf16.mxu0 0
    %248 = vmatpush1.bf16.msra.mxu0 0
    %249 = vmatprep.subr.bf16.mxu0 0
    %250 = vmatpush1.bf16.msra.mxu0 0
    %251 = vmatprep.subr.bf16.mxu0 0
    %252 = vmatpush1.bf16.msra.mxu0 0
    %253 = vmatprep.subr.bf16.mxu0 0
    %254 = vmatpush1.bf16.msra.mxu0 0
    %255 = vmatprep.subr.bf16.mxu0 0
    %256 = vmatpush1.bf16.msra.mxu0 0
    %257 = vmatprep.subr.bf16.mxu0 0
    %258 = vmatpush1.bf16.msra.mxu0 0
    %259 = vmatprep.mubr.bf16.mxu0 0
    %260 = vmatmul.mubr.bf16.gmra.mrb[0].mxu0 %v113
    %v261 = vpop.f32.mrb[0].mxu0
    %v262 = vadd.f32 %v174, %v261
    %v263 = vpop.f32.mrb[0].mxu0
    %v264 = vpop.f32.mrb[0].mxu0
    %v265 = vpop.f32.mrb[0].mxu0
    %266 = vdwg.mxu0
    %v267 = vld [vmem:[%s6] sm:$0x1]
    %v269 = vlaneseq
    %v270 = vshrl.u32 %v269, 7
    %v271 = vsub.s32 0, %v270
    %v272 = vrot.slane %v267, %v271
    %v274 = vadd.f32 %v262, %v272
    %v275 = vmax.f32 %v274, 0.0
    %v276 = vld [vmem:[%s7] sm:$0x1]
    %v278 = vlaneseq
    %v279 = vshrl.u32 %v278, 7
    %v280 = vsub.s32 0, %v279
    %v281 = vrot.slane %v276, %v280
    %v283 = vmul.f32 %v275, %v281
    %284 = vadd.xlane.f32.xlu0 %v283
    %v285 = vpop.xlane.xlu0 %284
    %s286 = sld [smem:[#allocation2]]
    %v287 = vstv %s286
    %v288 = vadd.f32 %v285, %v287
    %v290 = vlaneseq
    %v291 = vand.u32 %v290, 127
    %v292 = vlaneseq
    %v293 = vshrl.u32 %v292, 7
    %v294 = vsub.s32 %v291, %v293
    %v295 = vrot.slane %v288, %v294
    %vm297 = vcmask 57344
    %298 = vst.msk [vmem:[#allocation6] sm:$0x1] %vm297, %v295
    // Predicated region
    $region42: #{critic_forward.1} parent=1 // pred_check
      _
    $region43: #{critic_forward.1} parent=1 // pred_check_branch
      %300 = sbr.rel (0) target = $region45
    $region44: #{critic_forward.1} parent=1 // pred_region
      %s302 = ssub.s32 16, 16
      %303 = vsyncadd [#allocation5], %s302
      %s305 = sshll.u32 [#allocation6], 4
      %s306 = int_to_ptr.vmem [resolvable:$true] %s305
      %308 = dma.vmem_to_hbm [thread:$0]  %s306, 16, %s9, [#allocation5]
    $region45: #{critic_forward.1} parent=1 // pred_fallthru
      _
    // Predicated region
    $region46: #{critic_forward.1} parent=1 // pred_check
      _
    $region47: #{critic_forward.1} parent=1 // pred_check_branch
      %310 = sbr.rel (0) target = $region49
    $region48: #{critic_forward.1} parent=1 // pred_region
      %311 = dma.done [#allocation5], 16
    $region49: #{critic_forward.1} parent=1 // pred_fallthru
      _
    %312 = vsyncpa [#allocation4], 1
    %313 = vsyncpa [#allocation5], 1

</llo_original>
